<compile_context>
chip_gen: v7x
topology: tpu7x:2x2x1
jax: 0.10.0
libtpu: 0.0.40
codegen_flags: <defaults>
</compile_context>

<pallas_src>
import jax
import jax.numpy as jnp
from jax.experimental import pallas as pl
from jax.experimental.pallas import tpu as pltpu

# Problem sizes (small, consistent with the module).
N = 2
C1 = 4
C2 = 8
C_ = C1 // 2            # cv1 output channels
H = W = 16
HW = H * W
KS = (5, 9, 13)         # SPP max-pool kernel sizes (used by the reference)

C_PACK = 8              # packed cv1 rows: N*C_ real rows + zero pad -> full 8-sublane tile

assert (W & (W - 1)) == 0, "W must be a power of two for the shift-based row index"
_W_BITS = W.bit_length() - 1
assert N * C_ <= C_PACK
assert H > 4, "exact row-delta masks require wrap deltas (H-1, H-2) to differ from 1, 2"


def _silu(x):
    return x * jax.nn.sigmoid(x)


def _pool5(y, shifts_w, shifts_h, neg):
    """5x5 max pool, stride 1, pad 2 (-inf padding) on a flattened (C_PACK, H*W) tile.

    Separable: W-direction max first, then H-direction max. shifts_w / shifts_h
    are precomputed (roll_amount, valid_mask) pairs.
    """
    r = y
    for a, m in shifts_w:
        r = jnp.maximum(r, jnp.where(m, pltpu.roll(y, a, axis=1), neg))
    out = r
    for a, m in shifts_h:
        out = jnp.maximum(out, jnp.where(m, pltpu.roll(r, a, axis=1), neg))
    return out


def spp_kernel(x_ref, w1_ref, b1_ref, w2_ref, b2_ref, o_ref):
    # x_ref : (N*C1, HW)          VMEM  (batch*channel on sublanes)
    # w1_ref: (C_PACK, N*C1)      VMEM  block-diagonal cv1 weight (BN folded)
    # b1_ref: (C_PACK, 1)         VMEM
    # w2_ref: (N*C2, 4*C_PACK)    VMEM  batch-expanded cv2 weight (BN folded)
    # b2_ref: (N*C2, 1)           VMEM
    # o_ref : (N*C2, HW)          VMEM
    neg = jnp.float32(-jnp.inf)

    # Row index of every flattened lane position (flat = h*W + w).
    h_idx = jax.lax.broadcasted_iota(jnp.int32, (C_PACK, HW), 1) >> _W_BITS

    def shift_mask(amount, dh):
        # Roll the row-index map with the same op as the data, so the mask is
        # valid under either roll-direction convention; require the EXACT row
        # delta so wrap-around rows can never leak through.
        h_src = pltpu.roll(h_idx, amount, axis=1)
        return jnp.abs(h_src - h_idx) == dh

    shifts_w = []   # +-1, +-2 along W (source must stay in the same row)
    shifts_h = []   # +-W, +-2W along H (source row delta exactly d)
    for d in (1, 2):
        for a in (d, HW - d):
            shifts_w.append((a, shift_mask(a, 0)))
        for a in (d * W, HW - d * W):
            shifts_h.append((a, shift_mask(a, d)))

    # cv1 (1x1 conv, BN folded, SiLU) for BOTH batch elements: one MXU dot with
    # a block-diagonal weight. Rows N*C_..C_PACK-1 are zero padding.
    y1 = _silu(jnp.dot(w1_ref[...], x_ref[...],
                       preferred_element_type=jnp.float32) + b1_ref[...])   # (C_PACK, HW)

    # SPPF chained pooling on the packed tile: p5 = m5(y1), p9 = m9(y1), p13 = m13(y1).
    p5 = _pool5(y1, shifts_w, shifts_h, neg)
    p9 = _pool5(p5, shifts_w, shifts_h, neg)
    p13 = _pool5(p9, shifts_w, shifts_h, neg)

    # Concat on sublanes (four aligned 8-row tiles -> pure vreg stacking), then
    # cv2 as a single MXU dot + bias + SiLU, stored lane-dense in one go.
    cat = jnp.concatenate([y1, p5, p9, p13], axis=0)                         # (4*C_PACK, HW)
    o_ref[...] = _silu(jnp.dot(w2_ref[...], cat,
                               preferred_element_type=jnp.float32) + b2_ref[...])


def _pack_params(w1, b1, w2, b2):
    """Host-side packing of the (BN-folded) 1x1 conv weights for the batch-packed layout."""
    w1_t = jnp.asarray(w1, jnp.float32).T     # (C_, C1)
    w2_t = jnp.asarray(w2, jnp.float32).T     # (C2, 4*C_)

    # cv1: block-diagonal over batch, zero-padded to C_PACK rows.
    w1b = jnp.zeros((C_PACK, N * C1), jnp.float32)
    b1b = jnp.zeros((C_PACK, 1), jnp.float32)
    for n in range(N):
        w1b = w1b.at[n * C_:(n + 1) * C_, n * C1:(n + 1) * C1].set(w1_t)
        b1b = b1b.at[n * C_:(n + 1) * C_, 0].set(jnp.asarray(b1, jnp.float32))

    # cv2: output row n*C2 + c reads branch br / batch n / channel k from cat row
    # br*C_PACK + n*C_ + k; padded cat rows get zero columns.
    w2b = jnp.zeros((N * C2, 4 * C_PACK), jnp.float32)
    for n in range(N):
        for br in range(4):
            w2b = w2b.at[n * C2:(n + 1) * C2,
                         br * C_PACK + n * C_: br * C_PACK + (n + 1) * C_].set(
                w2_t[:, br * C_:(br + 1) * C_])
    b2b = jnp.tile(jnp.asarray(b2, jnp.float32), (N,))[:, None]   # (N*C2, 1)
    return w1b, b1b, w2b, b2b


def spp_forward(x_nchw, w1, b1, w2, b2):
    n, c1, h, w = x_nchw.shape
    assert (n, c1, h, w) == (N, C1, H, W)
    hw = h * w

    # NCHW -> (N*C1, H*W): pure reshape; batch*channel on sublanes, spatial on lanes.
    x = x_nchw.reshape(n * c1, hw)
    w1b, b1b, w2b, b2b = _pack_params(w1, b1, w2, b2)

    flops = 2 * N * hw * (C1 * C_ + 4 * C_ * C2)   # the two 1x1 convs
    transcendentals = N * hw * (C_ + C2)           # sigmoids of the two SiLUs
    bytes_accessed = 4 * (x.size + n * C2 * hw
                          + w1b.size + b1b.size + w2b.size + b2b.size)

    out = pl.pallas_call(
        spp_kernel,
        out_shape=jax.ShapeDtypeStruct((n * C2, hw), jnp.float32),
        in_specs=[
            pl.BlockSpec(memory_space=pltpu.MemorySpace.VMEM),   # x (packed)
            pl.BlockSpec(memory_space=pltpu.MemorySpace.VMEM),   # cv1 weight (block-diag)
            pl.BlockSpec(memory_space=pltpu.MemorySpace.VMEM),   # cv1 bias
            pl.BlockSpec(memory_space=pltpu.MemorySpace.VMEM),   # cv2 weight (batch-expanded)
            pl.BlockSpec(memory_space=pltpu.MemorySpace.VMEM),   # cv2 bias
        ],
        out_specs=pl.BlockSpec(memory_space=pltpu.MemorySpace.VMEM),
        cost_estimate=pl.CostEstimate(flops=flops,
                                      transcendentals=transcendentals,
                                      bytes_accessed=bytes_accessed),
    )(x, w1b, b1b, w2b, b2b)

    # (N*C2, H*W) -> NCHW: pure reshape.
    return out.reshape(n, C2, h, w)


# ----------------------- pure-JAX reference (for checking) -----------------------
def _maxpool_ref(x_nchw, k):
    p = k // 2
    return jax.lax.reduce_window(
        x_nchw, -jnp.inf, jax.lax.max,
        window_dimensions=(1, 1, k, k),
        window_strides=(1, 1, 1, 1),
        padding=[(0, 0), (0, 0), (p, p), (p, p)],
    )


def spp_ref(x_nchw, w1, b1, w2, b2):
    y1 = jnp.einsum('nchw,cd->ndhw', x_nchw, w1) + b1.reshape(1, -1, 1, 1)
    y1 = _silu(y1)
    cat = jnp.concatenate([y1] + [_maxpool_ref(y1, k) for k in KS], axis=1)
    z = jnp.einsum('nchw,cd->ndhw', cat, w2) + b2.reshape(1, -1, 1, 1)
    return _silu(z)


if __name__ == "__main__":
    key = jax.random.PRNGKey(0)
    kx, k1, k2, k3, k4 = jax.random.split(key, 5)

    x = jax.random.normal(kx, (N, C1, H, W), dtype=jnp.float32)

    # Deterministic synthetic parameters (BN already folded into weight/bias).
    w1 = 0.3 * jax.random.normal(k1, (C1, C_), dtype=jnp.float32)       # cv1
    b1 = 0.1 * jax.random.normal(k2, (C_,), dtype=jnp.float32)
    w2 = 0.3 * jax.random.normal(k3, (4 * C_, C2), dtype=jnp.float32)   # cv2
    b2 = 0.1 * jax.random.normal(k4, (C2,), dtype=jnp.float32)

    y = spp_forward(x, w1, b1, w2, b2)
    y = jax.block_until_ready(y)

    y_ref = spp_ref(x, w1, b1, w2, b2)
    assert y.shape == (N, C2, H, W), y.shape
    assert jnp.allclose(y, y_ref, rtol=1e-5, atol=1e-5), float(jnp.max(jnp.abs(y - y_ref)))

    print("KERNEL_OK")
</pallas_src>

<mosaic_0001>
module attributes {stable_mosaic.version = 11 : i64} {
  func.func @spp_kernel(%arg0: memref<8x256xf32, #tpu.memory_space<vmem>>, %arg1: memref<8x8xf32, #tpu.memory_space<vmem>>, %arg2: memref<8x1xf32, #tpu.memory_space<vmem>>, %arg3: memref<16x32xf32, #tpu.memory_space<vmem>>, %arg4: memref<16x1xf32, #tpu.memory_space<vmem>>, %arg5: memref<16x256xf32, #tpu.memory_space<vmem>>) attributes {dimension_semantics = [], scalar_prefetch = 0 : i64, scratch_operands = 0 : i64, tpu.core_type = #tpu.core_type<tc>} {
    %0 = tpu.iota {dimensions = array<i32: 1>} : vector<8x256xi32>
    %c4_i32 = arith.constant 4 : i32
    %1 = vector.broadcast %c4_i32 : i32 to vector<8x256xi32>
    %2 = arith.shrsi %0, %1 : vector<8x256xi32>
    %c1_i32 = arith.constant 1 : i32
    %3 = tpu.dynamic_rotate %2 by %c1_i32 dim 1 : vector<8x256xi32>, i32 -> vector<8x256xi32>
    %4 = arith.subi %3, %2 : vector<8x256xi32>
    %5 = math.absi %4 : vector<8x256xi32>
    %c0_i32 = arith.constant 0 : i32
    %6 = vector.broadcast %c0_i32 : i32 to vector<8x256xi32>
    %7 = arith.cmpi eq, %5, %6 : vector<8x256xi32>
    %c255_i32 = arith.constant 255 : i32
    %8 = tpu.dynamic_rotate %2 by %c255_i32 dim 1 : vector<8x256xi32>, i32 -> vector<8x256xi32>
    %9 = arith.subi %8, %2 : vector<8x256xi32>
    %10 = math.absi %9 : vector<8x256xi32>
    %c0_i32_0 = arith.constant 0 : i32
    %11 = vector.broadcast %c0_i32_0 : i32 to vector<8x256xi32>
    %12 = arith.cmpi eq, %10, %11 : vector<8x256xi32>
    %c16_i32 = arith.constant 16 : i32
    %13 = tpu.dynamic_rotate %2 by %c16_i32 dim 1 : vector<8x256xi32>, i32 -> vector<8x256xi32>
    %14 = arith.subi %13, %2 : vector<8x256xi32>
    %15 = math.absi %14 : vector<8x256xi32>
    %c1_i32_1 = arith.constant 1 : i32
    %16 = vector.broadcast %c1_i32_1 : i32 to vector<8x256xi32>
    %17 = arith.cmpi eq, %15, %16 : vector<8x256xi32>
    %c240_i32 = arith.constant 240 : i32
    %18 = tpu.dynamic_rotate %2 by %c240_i32 dim 1 : vector<8x256xi32>, i32 -> vector<8x256xi32>
    %19 = arith.subi %18, %2 : vector<8x256xi32>
    %20 = math.absi %19 : vector<8x256xi32>
    %c1_i32_2 = arith.constant 1 : i32
    %21 = vector.broadcast %c1_i32_2 : i32 to vector<8x256xi32>
    %22 = arith.cmpi eq, %20, %21 : vector<8x256xi32>
    %c2_i32 = arith.constant 2 : i32
    %23 = tpu.dynamic_rotate %2 by %c2_i32 dim 1 : vector<8x256xi32>, i32 -> vector<8x256xi32>
    %24 = arith.subi %23, %2 : vector<8x256xi32>
    %25 = math.absi %24 : vector<8x256xi32>
    %c0_i32_3 = arith.constant 0 : i32
    %26 = vector.broadcast %c0_i32_3 : i32 to vector<8x256xi32>
    %27 = arith.cmpi eq, %25, %26 : vector<8x256xi32>
    %c254_i32 = arith.constant 254 : i32
    %28 = tpu.dynamic_rotate %2 by %c254_i32 dim 1 : vector<8x256xi32>, i32 -> vector<8x256xi32>
    %29 = arith.subi %28, %2 : vector<8x256xi32>
    %30 = math.absi %29 : vector<8x256xi32>
    %c0_i32_4 = arith.constant 0 : i32
    %31 = vector.broadcast %c0_i32_4 : i32 to vector<8x256xi32>
    %32 = arith.cmpi eq, %30, %31 : vector<8x256xi32>
    %c32_i32 = arith.constant 32 : i32
    %33 = tpu.dynamic_rotate %2 by %c32_i32 dim 1 : vector<8x256xi32>, i32 -> vector<8x256xi32>
    %34 = arith.subi %33, %2 : vector<8x256xi32>
    %35 = math.absi %34 : vector<8x256xi32>
    %c2_i32_5 = arith.constant 2 : i32
    %36 = vector.broadcast %c2_i32_5 : i32 to vector<8x256xi32>
    %37 = arith.cmpi eq, %35, %36 : vector<8x256xi32>
    %c224_i32 = arith.constant 224 : i32
    %38 = tpu.dynamic_rotate %2 by %c224_i32 dim 1 : vector<8x256xi32>, i32 -> vector<8x256xi32>
    %39 = arith.subi %38, %2 : vector<8x256xi32>
    %40 = math.absi %39 : vector<8x256xi32>
    %c2_i32_6 = arith.constant 2 : i32
    %41 = vector.broadcast %c2_i32_6 : i32 to vector<8x256xi32>
    %42 = arith.cmpi eq, %40, %41 : vector<8x256xi32>
    %c0 = arith.constant 0 : index
    %c0_7 = arith.constant 0 : index
    %43 = vector.load %arg1[%c0, %c0_7] : memref<8x8xf32, #tpu.memory_space<vmem>>, vector<8x8xf32>
    %c0_8 = arith.constant 0 : index
    %c0_9 = arith.constant 0 : index
    %44 = vector.load %arg0[%c0_8, %c0_9] : memref<8x256xf32, #tpu.memory_space<vmem>>, vector<8x256xf32>
    %cst = arith.constant dense<0.000000e+00> : vector<8x256xf32>
    %45 = tpu.matmul %43, %44, %cst {dimension_numbers = #tpu.dot_dimension_numbers<[1], [0], [0], [1], [0, 0, 1, 1], [], []>} : vector<8x8xf32>, vector<8x256xf32>, vector<8x256xf32> -> vector<8x256xf32>
    %c0_10 = arith.constant 0 : index
    %c0_11 = arith.constant 0 : index
    %46 = vector.load %arg2[%c0_10, %c0_11] : memref<8x1xf32, #tpu.memory_space<vmem>>, vector<8x1xf32>
    %47 = vector.broadcast %46 : vector<8x1xf32> to vector<8x256xf32>
    %48 = arith.addf %45, %47 : vector<8x256xf32>
    %49 = arith.negf %48 : vector<8x256xf32>
    %50 = math.exp %49 : vector<8x256xf32>
    %cst_12 = arith.constant 1.000000e+00 : f32
    %51 = vector.broadcast %cst_12 : f32 to vector<8x256xf32>
    %52 = arith.addf %51, %50 : vector<8x256xf32>
    %53 = arith.divf %51, %52 : vector<8x256xf32>
    %54 = arith.mulf %48, %53 : vector<8x256xf32>
    %c1_i32_13 = arith.constant 1 : i32
    %55 = tpu.dynamic_rotate %54 by %c1_i32_13 dim 1 : vector<8x256xf32>, i32 -> vector<8x256xf32>
    %cst_14 = arith.constant 0xFF800000 : f32
    %56 = vector.broadcast %cst_14 : f32 to vector<8x256xf32>
    %57 = arith.select %7, %55, %56 : vector<8x256xi1>, vector<8x256xf32>
    %58 = arith.maximumf %54, %57 : vector<8x256xf32>
    %c255_i32_15 = arith.constant 255 : i32
    %59 = tpu.dynamic_rotate %54 by %c255_i32_15 dim 1 : vector<8x256xf32>, i32 -> vector<8x256xf32>
    %cst_16 = arith.constant 0xFF800000 : f32
    %60 = vector.broadcast %cst_16 : f32 to vector<8x256xf32>
    %61 = arith.select %12, %59, %60 : vector<8x256xi1>, vector<8x256xf32>
    %62 = arith.maximumf %58, %61 : vector<8x256xf32>
    %c2_i32_17 = arith.constant 2 : i32
    %63 = tpu.dynamic_rotate %54 by %c2_i32_17 dim 1 : vector<8x256xf32>, i32 -> vector<8x256xf32>
    %cst_18 = arith.constant 0xFF800000 : f32
    %64 = vector.broadcast %cst_18 : f32 to vector<8x256xf32>
    %65 = arith.select %27, %63, %64 : vector<8x256xi1>, vector<8x256xf32>
    %66 = arith.maximumf %62, %65 : vector<8x256xf32>
    %c254_i32_19 = arith.constant 254 : i32
    %67 = tpu.dynamic_rotate %54 by %c254_i32_19 dim 1 : vector<8x256xf32>, i32 -> vector<8x256xf32>
    %cst_20 = arith.constant 0xFF800000 : f32
    %68 = vector.broadcast %cst_20 : f32 to vector<8x256xf32>
    %69 = arith.select %32, %67, %68 : vector<8x256xi1>, vector<8x256xf32>
    %70 = arith.maximumf %66, %69 : vector<8x256xf32>
    %c16_i32_21 = arith.constant 16 : i32
    %71 = tpu.dynamic_rotate %70 by %c16_i32_21 dim 1 : vector<8x256xf32>, i32 -> vector<8x256xf32>
    %cst_22 = arith.constant 0xFF800000 : f32
    %72 = vector.broadcast %cst_22 : f32 to vector<8x256xf32>
    %73 = arith.select %17, %71, %72 : vector<8x256xi1>, vector<8x256xf32>
    %74 = arith.maximumf %70, %73 : vector<8x256xf32>
    %c240_i32_23 = arith.constant 240 : i32
    %75 = tpu.dynamic_rotate %70 by %c240_i32_23 dim 1 : vector<8x256xf32>, i32 -> vector<8x256xf32>
    %cst_24 = arith.constant 0xFF800000 : f32
    %76 = vector.broadcast %cst_24 : f32 to vector<8x256xf32>
    %77 = arith.select %22, %75, %76 : vector<8x256xi1>, vector<8x256xf32>
    %78 = arith.maximumf %74, %77 : vector<8x256xf32>
    %c32_i32_25 = arith.constant 32 : i32
    %79 = tpu.dynamic_rotate %70 by %c32_i32_25 dim 1 : vector<8x256xf32>, i32 -> vector<8x256xf32>
    %cst_26 = arith.constant 0xFF800000 : f32
    %80 = vector.broadcast %cst_26 : f32 to vector<8x256xf32>
    %81 = arith.select %37, %79, %80 : vector<8x256xi1>, vector<8x256xf32>
    %82 = arith.maximumf %78, %81 : vector<8x256xf32>
    %c224_i32_27 = arith.constant 224 : i32
    %83 = tpu.dynamic_rotate %70 by %c224_i32_27 dim 1 : vector<8x256xf32>, i32 -> vector<8x256xf32>
    %cst_28 = arith.constant 0xFF800000 : f32
    %84 = vector.broadcast %cst_28 : f32 to vector<8x256xf32>
    %85 = arith.select %42, %83, %84 : vector<8x256xi1>, vector<8x256xf32>
    %86 = arith.maximumf %82, %85 : vector<8x256xf32>
    %c1_i32_29 = arith.constant 1 : i32
    %87 = tpu.dynamic_rotate %86 by %c1_i32_29 dim 1 : vector<8x256xf32>, i32 -> vector<8x256xf32>
    %cst_30 = arith.constant 0xFF800000 : f32
    %88 = vector.broadcast %cst_30 : f32 to vector<8x256xf32>
    %89 = arith.select %7, %87, %88 : vector<8x256xi1>, vector<8x256xf32>
    %90 = arith.maximumf %86, %89 : vector<8x256xf32>
    %c255_i32_31 = arith.constant 255 : i32
    %91 = tpu.dynamic_rotate %86 by %c255_i32_31 dim 1 : vector<8x256xf32>, i32 -> vector<8x256xf32>
    %cst_32 = arith.constant 0xFF800000 : f32
    %92 = vector.broadcast %cst_32 : f32 to vector<8x256xf32>
    %93 = arith.select %12, %91, %92 : vector<8x256xi1>, vector<8x256xf32>
    %94 = arith.maximumf %90, %93 : vector<8x256xf32>
    %c2_i32_33 = arith.constant 2 : i32
    %95 = tpu.dynamic_rotate %86 by %c2_i32_33 dim 1 : vector<8x256xf32>, i32 -> vector<8x256xf32>
    %cst_34 = arith.constant 0xFF800000 : f32
    %96 = vector.broadcast %cst_34 : f32 to vector<8x256xf32>
    %97 = arith.select %27, %95, %96 : vector<8x256xi1>, vector<8x256xf32>
    %98 = arith.maximumf %94, %97 : vector<8x256xf32>
    %c254_i32_35 = arith.constant 254 : i32
    %99 = tpu.dynamic_rotate %86 by %c254_i32_35 dim 1 : vector<8x256xf32>, i32 -> vector<8x256xf32>
    %cst_36 = arith.constant 0xFF800000 : f32
    %100 = vector.broadcast %cst_36 : f32 to vector<8x256xf32>
    %101 = arith.select %32, %99, %100 : vector<8x256xi1>, vector<8x256xf32>
    %102 = arith.maximumf %98, %101 : vector<8x256xf32>
    %c16_i32_37 = arith.constant 16 : i32
    %103 = tpu.dynamic_rotate %102 by %c16_i32_37 dim 1 : vector<8x256xf32>, i32 -> vector<8x256xf32>
    %cst_38 = arith.constant 0xFF800000 : f32
    %104 = vector.broadcast %cst_38 : f32 to vector<8x256xf32>
    %105 = arith.select %17, %103, %104 : vector<8x256xi1>, vector<8x256xf32>
    %106 = arith.maximumf %102, %105 : vector<8x256xf32>
    %c240_i32_39 = arith.constant 240 : i32
    %107 = tpu.dynamic_rotate %102 by %c240_i32_39 dim 1 : vector<8x256xf32>, i32 -> vector<8x256xf32>
    %cst_40 = arith.constant 0xFF800000 : f32
    %108 = vector.broadcast %cst_40 : f32 to vector<8x256xf32>
    %109 = arith.select %22, %107, %108 : vector<8x256xi1>, vector<8x256xf32>
    %110 = arith.maximumf %106, %109 : vector<8x256xf32>
    %c32_i32_41 = arith.constant 32 : i32
    %111 = tpu.dynamic_rotate %102 by %c32_i32_41 dim 1 : vector<8x256xf32>, i32 -> vector<8x256xf32>
    %cst_42 = arith.constant 0xFF800000 : f32
    %112 = vector.broadcast %cst_42 : f32 to vector<8x256xf32>
    %113 = arith.select %37, %111, %112 : vector<8x256xi1>, vector<8x256xf32>
    %114 = arith.maximumf %110, %113 : vector<8x256xf32>
    %c224_i32_43 = arith.constant 224 : i32
    %115 = tpu.dynamic_rotate %102 by %c224_i32_43 dim 1 : vector<8x256xf32>, i32 -> vector<8x256xf32>
    %cst_44 = arith.constant 0xFF800000 : f32
    %116 = vector.broadcast %cst_44 : f32 to vector<8x256xf32>
    %117 = arith.select %42, %115, %116 : vector<8x256xi1>, vector<8x256xf32>
    %118 = arith.maximumf %114, %117 : vector<8x256xf32>
    %c1_i32_45 = arith.constant 1 : i32
    %119 = tpu.dynamic_rotate %118 by %c1_i32_45 dim 1 : vector<8x256xf32>, i32 -> vector<8x256xf32>
    %cst_46 = arith.constant 0xFF800000 : f32
    %120 = vector.broadcast %cst_46 : f32 to vector<8x256xf32>
    %121 = arith.select %7, %119, %120 : vector<8x256xi1>, vector<8x256xf32>
    %122 = arith.maximumf %118, %121 : vector<8x256xf32>
    %c255_i32_47 = arith.constant 255 : i32
    %123 = tpu.dynamic_rotate %118 by %c255_i32_47 dim 1 : vector<8x256xf32>, i32 -> vector<8x256xf32>
    %cst_48 = arith.constant 0xFF800000 : f32
    %124 = vector.broadcast %cst_48 : f32 to vector<8x256xf32>
    %125 = arith.select %12, %123, %124 : vector<8x256xi1>, vector<8x256xf32>
    %126 = arith.maximumf %122, %125 : vector<8x256xf32>
    %c2_i32_49 = arith.constant 2 : i32
    %127 = tpu.dynamic_rotate %118 by %c2_i32_49 dim 1 : vector<8x256xf32>, i32 -> vector<8x256xf32>
    %cst_50 = arith.constant 0xFF800000 : f32
    %128 = vector.broadcast %cst_50 : f32 to vector<8x256xf32>
    %129 = arith.select %27, %127, %128 : vector<8x256xi1>, vector<8x256xf32>
    %130 = arith.maximumf %126, %129 : vector<8x256xf32>
    %c254_i32_51 = arith.constant 254 : i32
    %131 = tpu.dynamic_rotate %118 by %c254_i32_51 dim 1 : vector<8x256xf32>, i32 -> vector<8x256xf32>
    %cst_52 = arith.constant 0xFF800000 : f32
    %132 = vector.broadcast %cst_52 : f32 to vector<8x256xf32>
    %133 = arith.select %32, %131, %132 : vector<8x256xi1>, vector<8x256xf32>
    %134 = arith.maximumf %130, %133 : vector<8x256xf32>
    %c16_i32_53 = arith.constant 16 : i32
    %135 = tpu.dynamic_rotate %134 by %c16_i32_53 dim 1 : vector<8x256xf32>, i32 -> vector<8x256xf32>
    %cst_54 = arith.constant 0xFF800000 : f32
    %136 = vector.broadcast %cst_54 : f32 to vector<8x256xf32>
    %137 = arith.select %17, %135, %136 : vector<8x256xi1>, vector<8x256xf32>
    %138 = arith.maximumf %134, %137 : vector<8x256xf32>
    %c240_i32_55 = arith.constant 240 : i32
    %139 = tpu.dynamic_rotate %134 by %c240_i32_55 dim 1 : vector<8x256xf32>, i32 -> vector<8x256xf32>
    %cst_56 = arith.constant 0xFF800000 : f32
    %140 = vector.broadcast %cst_56 : f32 to vector<8x256xf32>
    %141 = arith.select %22, %139, %140 : vector<8x256xi1>, vector<8x256xf32>
    %142 = arith.maximumf %138, %141 : vector<8x256xf32>
    %c32_i32_57 = arith.constant 32 : i32
    %143 = tpu.dynamic_rotate %134 by %c32_i32_57 dim 1 : vector<8x256xf32>, i32 -> vector<8x256xf32>
    %cst_58 = arith.constant 0xFF800000 : f32
    %144 = vector.broadcast %cst_58 : f32 to vector<8x256xf32>
    %145 = arith.select %37, %143, %144 : vector<8x256xi1>, vector<8x256xf32>
    %146 = arith.maximumf %142, %145 : vector<8x256xf32>
    %c224_i32_59 = arith.constant 224 : i32
    %147 = tpu.dynamic_rotate %134 by %c224_i32_59 dim 1 : vector<8x256xf32>, i32 -> vector<8x256xf32>
    %cst_60 = arith.constant 0xFF800000 : f32
    %148 = vector.broadcast %cst_60 : f32 to vector<8x256xf32>
    %149 = arith.select %42, %147, %148 : vector<8x256xi1>, vector<8x256xf32>
    %150 = arith.maximumf %146, %149 : vector<8x256xf32>
    %151 = tpu.concatenate %54, %86, %118, %150 in 0 : vector<8x256xf32>, vector<8x256xf32>, vector<8x256xf32>, vector<8x256xf32> -> vector<32x256xf32>
    %c0_61 = arith.constant 0 : index
    %c0_62 = arith.constant 0 : index
    %152 = vector.load %arg3[%c0_61, %c0_62] : memref<16x32xf32, #tpu.memory_space<vmem>>, vector<16x32xf32>
    %cst_63 = arith.constant dense<0.000000e+00> : vector<16x256xf32>
    %153 = tpu.matmul %152, %151, %cst_63 {dimension_numbers = #tpu.dot_dimension_numbers<[1], [0], [0], [1], [0, 0, 1, 1], [], []>} : vector<16x32xf32>, vector<32x256xf32>, vector<16x256xf32> -> vector<16x256xf32>
    %c0_64 = arith.constant 0 : index
    %c0_65 = arith.constant 0 : index
    %154 = vector.load %arg4[%c0_64, %c0_65] : memref<16x1xf32, #tpu.memory_space<vmem>>, vector<16x1xf32>
    %155 = vector.broadcast %154 : vector<16x1xf32> to vector<16x256xf32>
    %156 = arith.addf %153, %155 : vector<16x256xf32>
    %157 = arith.negf %156 : vector<16x256xf32>
    %158 = math.exp %157 : vector<16x256xf32>
    %cst_66 = arith.constant 1.000000e+00 : f32
    %159 = vector.broadcast %cst_66 : f32 to vector<16x256xf32>
    %160 = arith.addf %159, %158 : vector<16x256xf32>
    %161 = arith.divf %159, %160 : vector<16x256xf32>
    %162 = arith.mulf %156, %161 : vector<16x256xf32>
    %c0_67 = arith.constant 0 : index
    %c0_68 = arith.constant 0 : index
    %163 = vector.load %arg5[%c0_67, %c0_68] : memref<16x256xf32, #tpu.memory_space<vmem>>, vector<16x256xf32>
    tpu.vector_store %arg5[%c0_67, %c0_68], %162 {strides = array<i32>} : memref<16x256xf32, #tpu.memory_space<vmem>>, vector<16x256xf32>,
    return
  }
}

</mosaic_0001>

<llo_original>
// kernel: tpu_custom_call.1
$region0: #{tpu_custom_call.1}
  #allocation0 [shape = 'u32[]', space=smem, size = 0x4, offset = 0x4, fixed_abs, tag = 'smem constant byte address 0x4 - core index']
  #allocation1 [shape = 'u32[144,128]{1,0:T(1,128)}', space=vmem, size = 0x12000, scoped, tag = 'internal scratch']
  %s0 = inlined_call_operand.vmem [shape: f32[8,256], index: 0, kind: input, shape index: {}]
  %s1 = inlined_call_operand.hbm [shape: f32[8,8], index: 1, kind: input, shape index: {}]
  %s2 = inlined_call_operand.vmem [shape: f32[8,1], index: 2, kind: input, shape index: {}]
  %s3 = inlined_call_operand.vmem [shape: f32[16,32], index: 3, kind: input, shape index: {}]
  %s4 = inlined_call_operand.vmem [shape: f32[16,1], index: 4, kind: input, shape index: {}]
  %s5 = inlined_call_operand.hbm [shape: f32[16,256], index: 5, kind: output, shape index: {}]
  %s6 = sld [smem:[#allocation0]]
  $region34: #{tpu_custom_call.1} parent=0
    _
  %s8 = ssub.s32 1, %s6
  %s9 = scalar_select 0, %s8, %s6
  $region1: #{tpu_custom_call.1} parent=0
    #allocation2 [shape = 'u8[4096]{0}', space=vmem, size = 0x1000, scoped, tag = 'input window, operand 1, single buffered']
    #allocation3 [shape = 's32[1]{0}', space=sflag, size = 0x4, scoped, tag = 'scoped memory for tpu_custom_call.1']
    #allocation4 [shape = 's32[1]{0}', space=sflag, size = 0x4, scoped, tag = 'scoped memory for tpu_custom_call.1']
    #allocation5 [shape = 'u8[16384]{0}', space=vmem, size = 0x4000, scoped, tag = 'output window, operand 0, single buffered']
    %10 = vsyncpa [#allocation3], 0
    %11 = vsyncpa [#allocation4], 0
    // Predicated region
    $region2: #{tpu_custom_call.1} parent=1 // pred_check
      _
    $region3: #{tpu_custom_call.1} parent=1 // pred_check_branch
      %13 = sbr.rel (0) target = $region5
    $region4: #{tpu_custom_call.1} parent=1 // pred_region
      _
    $region5: #{tpu_custom_call.1} parent=1 // pred_fallthru
      _
    // Predicated region
    $region6: #{tpu_custom_call.1} parent=1 // pred_check
      _
    $region7: #{tpu_custom_call.1} parent=1 // pred_check_branch
      %15 = sbr.rel (0) target = $region9
    $region8: #{tpu_custom_call.1} parent=1 // pred_region
      %s17 = ssub.s32 128, 128
      %18 = vsyncadd [#allocation3], %s17
      %s20 = sshll.u32 [#allocation2], 4
      %s21 = int_to_ptr.vmem [resolvable:$true] %s20
      %23 = dma.hbm_to_vmem [thread:$0]  %s1, 128, %s21, [#allocation3]
    $region9: #{tpu_custom_call.1} parent=1 // pred_fallthru
      _
    // Predicated region
    $region10: #{tpu_custom_call.1} parent=1 // pred_check
      _
    $region11: #{tpu_custom_call.1} parent=1 // pred_check_branch
      %25 = sbr.rel (0) target = $region13
    $region12: #{tpu_custom_call.1} parent=1 // pred_region
      _
    $region13: #{tpu_custom_call.1} parent=1 // pred_fallthru
      _
    // Predicated region
    $region14: #{tpu_custom_call.1} parent=1 // pred_check
      _
    $region15: #{tpu_custom_call.1} parent=1 // pred_check_branch
      %27 = sbr.rel (0) target = $region17
    $region16: #{tpu_custom_call.1} parent=1 // pred_region
      _
    $region17: #{tpu_custom_call.1} parent=1 // pred_fallthru
      _
    // Predicated region
    $region18: #{tpu_custom_call.1} parent=1 // pred_check
      _
    $region19: #{tpu_custom_call.1} parent=1 // pred_check_branch
      %29 = sbr.rel (0) target = $region21
    $region20: #{tpu_custom_call.1} parent=1 // pred_region
      _
    $region21: #{tpu_custom_call.1} parent=1 // pred_fallthru
      _
    // Predicated region
    $region22: #{tpu_custom_call.1} parent=1 // pred_check
      _
    $region23: #{tpu_custom_call.1} parent=1 // pred_check_branch
      %31 = sbr.rel (0) target = $region25
    $region24: #{tpu_custom_call.1} parent=1 // pred_region
      %32 = dma.done [#allocation3], 128
    $region25: #{tpu_custom_call.1} parent=1 // pred_fallthru
      _
    %v33 = vlaneseq
    %v34 = vand.u32 %v33, 127
    %v35 = vadd.s32 %v34, 128
    %v36 = vshra.s32 %v34, 4
    %v37 = vshra.s32 %v35, 4
    %38 = vrot.lane.b32.xlu0 %v36, 1
    %v39 = vpop.permute.xlu0 %38
    %40 = vrot.lane.b32.xlu0 %v37, 1
    %v41 = vpop.permute.xlu0 %40
    %vm42 = vcmp.lt.s32.totalorder %v34, 1
    %v43 = vsel %vm42, %v39, %v41
    %v44 = vsel %vm42, %v41, %v39
    %v45 = vsub.s32 %v44, %v36
    %v46 = vsub.s32 %v43, %v37
    %vm47 = vcmp.lt.s32.totalorder %v45, 0
    %v48 = vsub.s32 0, %v45
    %v49 = vsel %vm47, %v48, %v45
    %vm50 = vcmp.lt.s32.totalorder %v46, 0
    %v51 = vsub.s32 0, %v46
    %v52 = vsel %vm50, %v51, %v46
    %vm53 = vcmp.eq.s32.totalorder %v49, 0
    %vm54 = vcmp.eq.s32.totalorder %v52, 0
    %55 = vrot.lane.b32.xlu0 %v36, 127
    %v56 = vpop.permute.xlu0 %55
    %57 = vrot.lane.b32.xlu0 %v37, 127
    %v58 = vpop.permute.xlu0 %57
    %vm59 = vcmp.lt.s32.totalorder %v34, 127
    %v60 = vsel %vm59, %v56, %v58
    %v61 = vsel %vm59, %v58, %v56
    %v62 = vsub.s32 %v60, %v36
    %v63 = vsub.s32 %v61, %v37
    %vm64 = vcmp.lt.s32.totalorder %v62, 0
    %v65 = vsub.s32 0, %v62
    %v66 = vsel %vm64, %v65, %v62
    %vm67 = vcmp.lt.s32.totalorder %v63, 0
    %v68 = vsub.s32 0, %v63
    %v69 = vsel %vm67, %v68, %v63
    %vm70 = vcmp.eq.s32.totalorder %v66, 0
    %vm71 = vcmp.eq.s32.totalorder %v69, 0
    %72 = vrot.lane.b32.xlu0 %v36, 16
    %v73 = vpop.permute.xlu0 %72
    %74 = vrot.lane.b32.xlu0 %v37, 16
    %v75 = vpop.permute.xlu0 %74
    %vm76 = vcmp.lt.s32.totalorder %v34, 16
    %v77 = vsel %vm76, %v73, %v75
    %v78 = vsel %vm76, %v75, %v73
    %v79 = vsub.s32 %v78, %v36
    %v80 = vsub.s32 %v77, %v37
    %vm81 = vcmp.lt.s32.totalorder %v79, 0
    %v82 = vsub.s32 0, %v79
    %v83 = vsel %vm81, %v82, %v79
    %vm84 = vcmp.lt.s32.totalorder %v80, 0
    %v85 = vsub.s32 0, %v80
    %v86 = vsel %vm84, %v85, %v80
    %vm87 = vcmp.eq.s32.totalorder %v83, 1
    %vm88 = vcmp.eq.s32.totalorder %v86, 1
    %89 = vrot.lane.b32.xlu0 %v36, 112
    %v90 = vpop.permute.xlu0 %89
    %91 = vrot.lane.b32.xlu0 %v37, 112
    %v92 = vpop.permute.xlu0 %91
    %vm93 = vcmp.lt.s32.totalorder %v34, 112
    %v94 = vsel %vm93, %v90, %v92
    %v95 = vsel %vm93, %v92, %v90
    %v96 = vsub.s32 %v94, %v36
    %v97 = vsub.s32 %v95, %v37
    %vm98 = vcmp.lt.s32.totalorder %v96, 0
    %v99 = vsub.s32 0, %v96
    %v100 = vsel %vm98, %v99, %v96
    %vm101 = vcmp.lt.s32.totalorder %v97, 0
    %v102 = vsub.s32 0, %v97
    %v103 = vsel %vm101, %v102, %v97
    %vm104 = vcmp.eq.s32.totalorder %v100, 1
    %vm105 = vcmp.eq.s32.totalorder %v103, 1
    %106 = vrot.lane.b32.xlu0 %v36, 2
    %v107 = vpop.permute.xlu0 %106
    %108 = vrot.lane.b32.xlu0 %v37, 2
    %v109 = vpop.permute.xlu0 %108
    %vm110 = vcmp.lt.s32.totalorder %v34, 2
    %v111 = vsel %vm110, %v107, %v109
    %v112 = vsel %vm110, %v109, %v107
    %v113 = vsub.s32 %v112, %v36
    %v114 = vsub.s32 %v111, %v37
    %vm115 = vcmp.lt.s32.totalorder %v113, 0
    %v116 = vsub.s32 0, %v113
    %v117 = vsel %vm115, %v116, %v113
    %vm118 = vcmp.lt.s32.totalorder %v114, 0
    %v119 = vsub.s32 0, %v114
    %v120 = vsel %vm118, %v119, %v114
    %vm121 = vcmp.eq.s32.totalorder %v117, 0
    %vm122 = vcmp.eq.s32.totalorder %v120, 0
    %123 = vrot.lane.b32.xlu0 %v36, 126
    %v124 = vpop.permute.xlu0 %123
    %125 = vrot.lane.b32.xlu0 %v37, 126
    %v126 = vpop.permute.xlu0 %125
    %vm127 = vcmp.lt.s32.totalorder %v34, 126
    %v128 = vsel %vm127, %v124, %v126
    %v129 = vsel %vm127, %v126, %v124
    %v130 = vsub.s32 %v128, %v36
    %v131 = vsub.s32 %v129, %v37
    %vm132 = vcmp.lt.s32.totalorder %v130, 0
    %v133 = vsub.s32 0, %v130
    %v134 = vsel %vm132, %v133, %v130
    %vm135 = vcmp.lt.s32.totalorder %v131, 0
    %v136 = vsub.s32 0, %v131
    %v137 = vsel %vm135, %v136, %v131
    %vm138 = vcmp.eq.s32.totalorder %v134, 0
    %vm139 = vcmp.eq.s32.totalorder %v137, 0
    %140 = vrot.lane.b32.xlu0 %v36, 32
    %v141 = vpop.permute.xlu0 %140
    %142 = vrot.lane.b32.xlu0 %v37, 32
    %v143 = vpop.permute.xlu0 %142
    %vm144 = vcmp.lt.s32.totalorder %v34, 32
    %v145 = vsel %vm144, %v141, %v143
    %v146 = vsel %vm144, %v143, %v141
    %v147 = vsub.s32 %v146, %v36
    %v148 = vsub.s32 %v145, %v37
    %vm149 = vcmp.lt.s32.totalorder %v147, 0
    %v150 = vsub.s32 0, %v147
    %v151 = vsel %vm149, %v150, %v147
    %vm152 = vcmp.lt.s32.totalorder %v148, 0
    %v153 = vsub.s32 0, %v148
    %v154 = vsel %vm152, %v153, %v148
    %vm155 = vcmp.eq.s32.totalorder %v151, 2
    %vm156 = vcmp.eq.s32.totalorder %v154, 2
    %157 = vrot.lane.b32.xlu0 %v36, 96
    %v158 = vpop.permute.xlu0 %157
    %159 = vrot.lane.b32.xlu0 %v37, 96
    %v160 = vpop.permute.xlu0 %159
    %vm161 = vcmp.lt.s32.totalorder %v34, 96
    %v162 = vsel %vm161, %v158, %v160
    %v163 = vsel %vm161, %v160, %v158
    %v164 = vsub.s32 %v162, %v36
    %v165 = vsub.s32 %v163, %v37
    %vm166 = vcmp.lt.s32.totalorder %v164, 0
    %v167 = vsub.s32 0, %v164
    %v168 = vsel %vm166, %v167, %v164
    %vm169 = vcmp.lt.s32.totalorder %v165, 0
    %v170 = vsub.s32 0, %v165
    %v171 = vsel %vm169, %v170, %v165
    %vm172 = vcmp.eq.s32.totalorder %v168, 2
    %vm173 = vcmp.eq.s32.totalorder %v171, 2
    %v174 = vld [vmem:[#allocation2] sm:$0xff]
    %v175 = vld [vmem:[%s0] sm:$0xff]
    %v176 = vld [vmem:[%s0 + $0x8] sm:$0xff]
    %v177 = vld [vmem:[%s2] sm:$0xff]
    %179 = vset.pattern.permute.xlu0 0
    %180 = vperm.xlu0 %179, %v177
    %v181 = vpop.permute.xlu0 %180
    %vm183 = vcmask 64512
    %v185 = vsel %vm183, %v174, 0
    %187 = vmatprep.subr.mxu0 %v176
    %188 = vmatpush1.msra.mxu0 %v175
    %189 = vmatprep.subr.mxu0 0.0
    %190 = vmatpush1.msra.mxu0 0.0
    %191 = vmatprep.subr.mxu0 0.0
    %192 = vmatpush1.msra.mxu0 0.0
    %193 = vmatprep.subr.mxu0 0.0
    %194 = vmatpush1.msra.mxu0 0.0
    %195 = vmatprep.subr.mxu0 0.0
    %196 = vmatpush1.msra.mxu0 0.0
    %197 = vmatprep.subr.mxu0 0.0
    %198 = vmatpush1.msra.mxu0 0.0
    %199 = vmatprep.subr.mxu0 0.0
    %200 = vmatpush1.msra.mxu0 0.0
    %201 = vmatprep.subr.mxu0 0.0
    %202 = vmatpush1.msra.mxu0 0.0
    %203 = vmatprep.subr.mxu0 0.0
    %204 = vmatpush1.msra.mxu0 0.0
    %205 = vmatprep.subr.mxu0 0.0
    %206 = vmatpush1.msra.mxu0 0.0
    %207 = vmatprep.subr.mxu0 0.0
    %208 = vmatpush1.msra.mxu0 0.0
    %209 = vmatprep.subr.mxu0 0.0
    %210 = vmatpush1.msra.mxu0 0.0
    %211 = vmatprep.subr.mxu0 0.0
    %212 = vmatpush1.msra.mxu0 0.0
    %213 = vmatprep.subr.mxu0 0.0
    %214 = vmatpush1.msra.mxu0 0.0
    %215 = vmatprep.subr.mxu0 0.0
    %216 = vmatpush1.msra.mxu0 0.0
    %217 = vmatprep.subr.mxu0 0.0
    %218 = vmatpush1.msra.mxu0 0.0
    %219 = vmatprep.subr.mxu0 0.0
    %220 = vmatpush1.msra.mxu0 0.0
    %221 = vmatprep.subr.mxu0 0.0
    %222 = vmatpush1.msra.mxu0 0.0
    %223 = vmatprep.subr.mxu0 0.0
    %224 = vmatpush1.msra.mxu0 0.0
    %225 = vmatprep.subr.mxu0 0.0
    %226 = vmatpush1.msra.mxu0 0.0
    %227 = vmatprep.subr.mxu0 0.0
    %228 = vmatpush1.msra.mxu0 0.0
    %229 = vmatprep.subr.mxu0 0.0
    %230 = vmatpush1.msra.mxu0 0.0
    %231 = vmatprep.subr.mxu0 0.0
    %232 = vmatpush1.msra.mxu0 0.0
    %233 = vmatprep.subr.mxu0 0.0
    %234 = vmatpush1.msra.mxu0 0.0
    %235 = vmatprep.subr.mxu0 0.0
    %236 = vmatpush1.msra.mxu0 0.0
    %237 = vmatprep.subr.mxu0 0.0
    %238 = vmatpush1.msra.mxu0 0.0
    %239 = vmatprep.subr.mxu0 0.0
    %240 = vmatpush1.msra.mxu0 0.0
    %241 = vmatprep.subr.mxu0 0.0
    %242 = vmatpush1.msra.mxu0 0.0
    %243 = vmatprep.subr.mxu0 0.0
    %244 = vmatpush1.msra.mxu0 0.0
    %245 = vmatprep.subr.mxu0 0.0
    %246 = vmatpush1.msra.mxu0 0.0
    %247 = vmatprep.subr.mxu0 0.0
    %248 = vmatpush1.msra.mxu0 0.0
    %249 = vmatprep.subr.mxu0 0.0
    %250 = vmatpush1.msra.mxu0 0.0
    %251 = vmatprep.mubr.f32.mxu0 0.0
    %252 = vmatmul.mubr.f32.gmra.mrb[0].mxu0 %v185
    %v253 = vpop.f32.mrb[0].mxu0
    %v254 = vadd.f32 %v181, %v253
    %v255 = vpop.f32.mrb[0].mxu0
    %v256 = vadd.f32 %v181, %v255
    %257 = vdwg.mxu0
    %v258 = vxor.u32 %v254, 2147483648
    %v259 = vxor.u32 %v256, 2147483648
    %v260 = vmul.f32 %v258, 1.442695
    %v261 = vpow.pop %v260
    %v262 = vmul.f32 %v259, 1.442695
    %v263 = vpow.pop %v262
    %v264 = vadd.f32 %v261, 1.0
    %v265 = vadd.f32 %v263, 1.0
    %v266 = vrcp.pop %v264
    %v267 = vmul.f32 1.0, %v266
    %v268 = vrcp.pop %v265
    %v269 = vmul.f32 1.0, %v268
    %v270 = vmul.f32 %v254, %v267
    %v271 = vmul.f32 %v256, %v269
    %272 = vrot.lane.b32.xlu0 %v270, 1
    %v273 = vpop.permute.xlu0 %272
    %274 = vrot.lane.b32.xlu0 %v271, 1
    %v275 = vpop.permute.xlu0 %274
    %v276 = vsel %vm42, %v273, %v275
    %v277 = vsel %vm42, %v275, %v273
    %v278 = vsel %vm53, %v277, -inf
    %v279 = vsel %vm54, %v276, -inf
    %v280 = vmax.f32 %v270, %v278
    %v281 = vmax.f32 %v271, %v279
    %282 = vrot.lane.b32.xlu0 %v270, 127
    %v283 = vpop.permute.xlu0 %282
    %284 = vrot.lane.b32.xlu0 %v271, 127
    %v285 = vpop.permute.xlu0 %284
    %v286 = vsel %vm59, %v283, %v285
    %v287 = vsel %vm59, %v285, %v283
    %v288 = vsel %vm70, %v286, -inf
    %v289 = vsel %vm71, %v287, -inf
    %v290 = vmax.f32 %v280, %v288
    %v291 = vmax.f32 %v281, %v289
    %292 = vrot.lane.b32.xlu0 %v270, 2
    %v293 = vpop.permute.xlu0 %292
    %294 = vrot.lane.b32.xlu0 %v271, 2
    %v295 = vpop.permute.xlu0 %294
    %v296 = vsel %vm110, %v293, %v295
    %v297 = vsel %vm110, %v295, %v293
    %v298 = vsel %vm121, %v297, -inf
    %v299 = vsel %vm122, %v296, -inf
    %v300 = vmax.f32 %v290, %v298
    %v301 = vmax.f32 %v291, %v299
    %302 = vrot.lane.b32.xlu0 %v270, 126
    %v303 = vpop.permute.xlu0 %302
    %304 = vrot.lane.b32.xlu0 %v271, 126
    %v305 = vpop.permute.xlu0 %304
    %v306 = vsel %vm127, %v303, %v305
    %v307 = vsel %vm127, %v305, %v303
    %v308 = vsel %vm138, %v306, -inf
    %v309 = vsel %vm139, %v307, -inf
    %v310 = vmax.f32 %v300, %v308
    %v311 = vmax.f32 %v301, %v309
    %312 = vrot.lane.b32.xlu0 %v310, 16
    %v313 = vpop.permute.xlu0 %312
    %314 = vrot.lane.b32.xlu0 %v311, 16
    %v315 = vpop.permute.xlu0 %314
    %v316 = vsel %vm76, %v313, %v315
    %v317 = vsel %vm76, %v315, %v313
    %v318 = vsel %vm87, %v317, -inf
    %v319 = vsel %vm88, %v316, -inf
    %v320 = vmax.f32 %v310, %v318
    %v321 = vmax.f32 %v311, %v319
    %322 = vrot.lane.b32.xlu0 %v310, 112
    %v323 = vpop.permute.xlu0 %322
    %324 = vrot.lane.b32.xlu0 %v311, 112
    %v325 = vpop.permute.xlu0 %324
    %v326 = vsel %vm93, %v323, %v325
    %v327 = vsel %vm93, %v325, %v323
    %v328 = vsel %vm104, %v326, -inf
    %v329 = vsel %vm105, %v327, -inf
    %v330 = vmax.f32 %v320, %v328
    %v331 = vmax.f32 %v321, %v329
    %332 = vrot.lane.b32.xlu0 %v310, 32
    %v333 = vpop.permute.xlu0 %332
    %334 = vrot.lane.b32.xlu0 %v311, 32
    %v335 = vpop.permute.xlu0 %334
    %v336 = vsel %vm144, %v333, %v335
    %v337 = vsel %vm144, %v335, %v333
    %v338 = vsel %vm155, %v337, -inf
    %v339 = vsel %vm156, %v336, -inf
    %v340 = vmax.f32 %v330, %v338
    %v341 = vmax.f32 %v331, %v339
    %342 = vrot.lane.b32.xlu0 %v310, 96
    %v343 = vpop.permute.xlu0 %342
    %344 = vrot.lane.b32.xlu0 %v311, 96
    %v345 = vpop.permute.xlu0 %344
    %v346 = vsel %vm161, %v343, %v345
    %v347 = vsel %vm161, %v345, %v343
    %v348 = vsel %vm172, %v346, -inf
    %v349 = vsel %vm173, %v347, -inf
    %v350 = vmax.f32 %v340, %v348
    %v351 = vmax.f32 %v341, %v349
    %352 = vrot.lane.b32.xlu0 %v350, 1
    %v353 = vpop.permute.xlu0 %352
    %354 = vrot.lane.b32.xlu0 %v351, 1
    %v355 = vpop.permute.xlu0 %354
    %v356 = vsel %vm42, %v353, %v355
    %v357 = vsel %vm42, %v355, %v353
    %v358 = vsel %vm53, %v357, -inf
    %v359 = vsel %vm54, %v356, -inf
    %v360 = vmax.f32 %v350, %v358
    %v361 = vmax.f32 %v351, %v359
    %362 = vrot.lane.b32.xlu0 %v350, 127
    %v363 = vpop.permute.xlu0 %362
    %364 = vrot.lane.b32.xlu0 %v351, 127
    %v365 = vpop.permute.xlu0 %364
    %v366 = vsel %vm59, %v363, %v365
    %v367 = vsel %vm59, %v365, %v363
    %v368 = vsel %vm70, %v366, -inf
    %v369 = vsel %vm71, %v367, -inf
    %v370 = vmax.f32 %v360, %v368
    %v371 = vmax.f32 %v361, %v369
    %372 = vrot.lane.b32.xlu0 %v350, 2
    %v373 = vpop.permute.xlu0 %372
    %374 = vrot.lane.b32.xlu0 %v351, 2
    %v375 = vpop.permute.xlu0 %374
    %v376 = vsel %vm110, %v373, %v375
    %v377 = vsel %vm110, %v375, %v373
    %v378 = vsel %vm121, %v377, -inf
    %v379 = vsel %vm122, %v376, -inf
    %v380 = vmax.f32 %v370, %v378
    %v381 = vmax.f32 %v371, %v379
    %382 = vrot.lane.b32.xlu0 %v350, 126
    %v383 = vpop.permute.xlu0 %382
    %384 = vrot.lane.b32.xlu0 %v351, 126
    %v385 = vpop.permute.xlu0 %384
    %v386 = vsel %vm127, %v383, %v385
    %v387 = vsel %vm127, %v385, %v383
    %v388 = vsel %vm138, %v386, -inf
    %v389 = vsel %vm139, %v387, -inf
    %v390 = vmax.f32 %v380, %v388
    %v391 = vmax.f32 %v381, %v389
    %392 = vrot.lane.b32.xlu0 %v390, 16
    %v393 = vpop.permute.xlu0 %392
    %394 = vrot.lane.b32.xlu0 %v391, 16
    %v395 = vpop.permute.xlu0 %394
    %v396 = vsel %vm76, %v393, %v395
    %v397 = vsel %vm76, %v395, %v393
    %v398 = vsel %vm87, %v397, -inf
    %v399 = vsel %vm88, %v396, -inf
    %v400 = vmax.f32 %v390, %v398
    %v401 = vmax.f32 %v391, %v399
    %402 = vrot.lane.b32.xlu0 %v390, 112
    %v403 = vpop.permute.xlu0 %402
    %404 = vrot.lane.b32.xlu0 %v391, 112
    %v405 = vpop.permute.xlu0 %404
    %v406 = vsel %vm93, %v403, %v405
    %v407 = vsel %vm93, %v405, %v403
    %v408 = vsel %vm104, %v406, -inf
    %v409 = vsel %vm105, %v407, -inf
    %v410 = vmax.f32 %v400, %v408
    %v411 = vmax.f32 %v401, %v409
    %412 = vrot.lane.b32.xlu0 %v390, 32
    %v413 = vpop.permute.xlu0 %412
    %414 = vrot.lane.b32.xlu0 %v391, 32
    %v415 = vpop.permute.xlu0 %414
    %v416 = vsel %vm144, %v413, %v415
    %v417 = vsel %vm144, %v415, %v413
    %v418 = vsel %vm155, %v417, -inf
    %v419 = vsel %vm156, %v416, -inf
    %v420 = vmax.f32 %v410, %v418
    %v421 = vmax.f32 %v411, %v419
    %422 = vrot.lane.b32.xlu0 %v390, 96
    %v423 = vpop.permute.xlu0 %422
    %424 = vrot.lane.b32.xlu0 %v391, 96
    %v425 = vpop.permute.xlu0 %424
    %v426 = vsel %vm161, %v423, %v425
    %v427 = vsel %vm161, %v425, %v423
    %v428 = vsel %vm172, %v426, -inf
    %v429 = vsel %vm173, %v427, -inf
    %v430 = vmax.f32 %v420, %v428
    %v431 = vmax.f32 %v421, %v429
    %432 = vrot.lane.b32.xlu0 %v430, 1
    %v433 = vpop.permute.xlu0 %432
    %434 = vrot.lane.b32.xlu0 %v431, 1
    %v435 = vpop.permute.xlu0 %434
    %v436 = vsel %vm42, %v433, %v435
    %v437 = vsel %vm42, %v435, %v433
    %v438 = vsel %vm53, %v437, -inf
    %v439 = vsel %vm54, %v436, -inf
    %v440 = vmax.f32 %v430, %v438
    %v441 = vmax.f32 %v431, %v439
    %442 = vrot.lane.b32.xlu0 %v430, 127
    %v443 = vpop.permute.xlu0 %442
    %444 = vrot.lane.b32.xlu0 %v431, 127
    %v445 = vpop.permute.xlu0 %444
    %v446 = vsel %vm59, %v443, %v445
    %v447 = vsel %vm59, %v445, %v443
    %v448 = vsel %vm70, %v446, -inf
    %v449 = vsel %vm71, %v447, -inf
    %v450 = vmax.f32 %v440, %v448
    %v451 = vmax.f32 %v441, %v449
    %452 = vrot.lane.b32.xlu0 %v430, 2
    %v453 = vpop.permute.xlu0 %452
    %454 = vrot.lane.b32.xlu0 %v431, 2
    %v455 = vpop.permute.xlu0 %454
    %v456 = vsel %vm110, %v453, %v455
    %v457 = vsel %vm110, %v455, %v453
    %v458 = vsel %vm121, %v457, -inf
    %v459 = vsel %vm122, %v456, -inf
    %v460 = vmax.f32 %v450, %v458
    %v461 = vmax.f32 %v451, %v459
    %462 = vrot.lane.b32.xlu0 %v430, 126
    %v463 = vpop.permute.xlu0 %462
    %464 = vrot.lane.b32.xlu0 %v431, 126
    %v465 = vpop.permute.xlu0 %464
    %v466 = vsel %vm127, %v463, %v465
    %v467 = vsel %vm127, %v465, %v463
    %v468 = vsel %vm138, %v466, -inf
    %v469 = vsel %vm139, %v467, -inf
    %v470 = vmax.f32 %v460, %v468
    %v471 = vmax.f32 %v461, %v469
    %472 = vrot.lane.b32.xlu0 %v470, 16
    %v473 = vpop.permute.xlu0 %472
    %474 = vrot.lane.b32.xlu0 %v471, 16
    %v475 = vpop.permute.xlu0 %474
    %v476 = vsel %vm76, %v473, %v475
    %v477 = vsel %vm76, %v475, %v473
    %v478 = vsel %vm87, %v477, -inf
    %v479 = vsel %vm88, %v476, -inf
    %v480 = vmax.f32 %v470, %v478
    %v481 = vmax.f32 %v471, %v479
    %482 = vrot.lane.b32.xlu0 %v470, 112
    %v483 = vpop.permute.xlu0 %482
    %484 = vrot.lane.b32.xlu0 %v471, 112
    %v485 = vpop.permute.xlu0 %484
    %v486 = vsel %vm93, %v483, %v485
    %v487 = vsel %vm93, %v485, %v483
    %v488 = vsel %vm104, %v486, -inf
    %v489 = vsel %vm105, %v487, -inf
    %v490 = vmax.f32 %v480, %v488
    %v491 = vmax.f32 %v481, %v489
    %492 = vrot.lane.b32.xlu0 %v470, 32
    %v493 = vpop.permute.xlu0 %492
    %494 = vrot.lane.b32.xlu0 %v471, 32
    %v495 = vpop.permute.xlu0 %494
    %v496 = vsel %vm144, %v493, %v495
    %v497 = vsel %vm144, %v495, %v493
    %v498 = vsel %vm155, %v497, -inf
    %v499 = vsel %vm156, %v496, -inf
    %v500 = vmax.f32 %v490, %v498
    %v501 = vmax.f32 %v491, %v499
    %502 = vrot.lane.b32.xlu0 %v470, 96
    %v503 = vpop.permute.xlu0 %502
    %504 = vrot.lane.b32.xlu0 %v471, 96
    %v505 = vpop.permute.xlu0 %504
    %v506 = vsel %vm161, %v503, %v505
    %v507 = vsel %vm161, %v505, %v503
    %v508 = vsel %vm172, %v506, -inf
    %v509 = vsel %vm173, %v507, -inf
    %v510 = vmax.f32 %v500, %v508
    %v511 = vmax.f32 %v501, %v509
    %v512 = vld [vmem:[%s3] sm:$0xff]
    %v513 = vld [vmem:[%s3 + $0x8] sm:$0xff]
    %v514 = vld [vmem:[%s4] sm:$0xff]
    %v515 = vld [vmem:[%s4 + $0x8] sm:$0xff]
    %517 = vset.pattern.permute.xlu0 0
    %518 = vperm.xlu0 %517, %v514
    %v519 = vpop.permute.xlu0 %518
    %522 = vset.pattern.permute.xlu0 0
    %523 = vperm.xlu0 %522, %v515
    %v524 = vpop.permute.xlu0 %523
    %vm526 = vcmask 261120
    %v528 = vsel %vm526, %v512, 0
    %v531 = vsel %vm526, %v513, 0
    %533 = vmatprep.subr.mxu0 %v271
    %534 = vmatpush1.msra.mxu0 %v270
    %535 = vmatprep.subr.mxu0 %v351
    %536 = vmatpush1.msra.mxu0 %v350
    %537 = vmatprep.subr.mxu0 %v431
    %538 = vmatpush1.msra.mxu0 %v430
    %539 = vmatprep.subr.mxu0 %v511
    %540 = vmatpush1.msra.mxu0 %v510
    %541 = vmatprep.subr.mxu0 0.0
    %542 = vmatpush1.msra.mxu0 0.0
    %543 = vmatprep.subr.mxu0 0.0
    %544 = vmatpush1.msra.mxu0 0.0
    %545 = vmatprep.subr.mxu0 0.0
    %546 = vmatpush1.msra.mxu0 0.0
    %547 = vmatprep.subr.mxu0 0.0
    %548 = vmatpush1.msra.mxu0 0.0
    %549 = vmatprep.subr.mxu0 0.0
    %550 = vmatpush1.msra.mxu0 0.0
    %551 = vmatprep.subr.mxu0 0.0
    %552 = vmatpush1.msra.mxu0 0.0
    %553 = vmatprep.subr.mxu0 0.0
    %554 = vmatpush1.msra.mxu0 0.0
    %555 = vmatprep.subr.mxu0 0.0
    %556 = vmatpush1.msra.mxu0 0.0
    %557 = vmatprep.subr.mxu0 0.0
    %558 = vmatpush1.msra.mxu0 0.0
    %559 = vmatprep.subr.mxu0 0.0
    %560 = vmatpush1.msra.mxu0 0.0
    %561 = vmatprep.subr.mxu0 0.0
    %562 = vmatpush1.msra.mxu0 0.0
    %563 = vmatprep.subr.mxu0 0.0
    %564 = vmatpush1.msra.mxu0 0.0
    %565 = vmatprep.subr.mxu0 0.0
    %566 = vmatpush1.msra.mxu0 0.0
    %567 = vmatprep.subr.mxu0 0.0
    %568 = vmatpush1.msra.mxu0 0.0
    %569 = vmatprep.subr.mxu0 0.0
    %570 = vmatpush1.msra.mxu0 0.0
    %571 = vmatprep.subr.mxu0 0.0
    %572 = vmatpush1.msra.mxu0 0.0
    %573 = vmatprep.subr.mxu0 0.0
    %574 = vmatpush1.msra.mxu0 0.0
    %575 = vmatprep.subr.mxu0 0.0
    %576 = vmatpush1.msra.mxu0 0.0
    %577 = vmatprep.subr.mxu0 0.0
    %578 = vmatpush1.msra.mxu0 0.0
    %579 = vmatprep.subr.mxu0 0.0
    %580 = vmatpush1.msra.mxu0 0.0
    %581 = vmatprep.subr.mxu0 0.0
    %582 = vmatpush1.msra.mxu0 0.0
    %583 = vmatprep.subr.mxu0 0.0
    %584 = vmatpush1.msra.mxu0 0.0
    %585 = vmatprep.subr.mxu0 0.0
    %586 = vmatpush1.msra.mxu0 0.0
    %587 = vmatprep.subr.mxu0 0.0
    %588 = vmatpush1.msra.mxu0 0.0
    %589 = vmatprep.subr.mxu0 0.0
    %590 = vmatpush1.msra.mxu0 0.0
    %591 = vmatprep.subr.mxu0 0.0
    %592 = vmatpush1.msra.mxu0 0.0
    %593 = vmatprep.subr.mxu0 0.0
    %594 = vmatpush1.msra.mxu0 0.0
    %595 = vmatprep.subr.mxu0 0.0
    %596 = vmatpush1.msra.mxu0 0.0
    %597 = vmatprep.mubr.f32.mxu0 0.0
    %598 = vmatmul.mubr.f32.gmra.mrb[0].mxu0 %v528
    %v599 = vpop.f32.mrb[0].mxu0
    %v600 = vadd.f32 %v519, %v599
    %v601 = vpop.f32.mrb[0].mxu0
    %v602 = vadd.f32 %v519, %v601
    %603 = vmatprep.mubr.f32.mxu0 0.0
    %604 = vmatmul.mubr.f32.gmra.mrb[0].mxu0 %v531
    %v605 = vpop.f32.mrb[0].mxu0
    %v606 = vadd.f32 %v524, %v605
    %v607 = vpop.f32.mrb[0].mxu0
    %v608 = vadd.f32 %v524, %v607
    %609 = vdwg.mxu0
    %v610 = vxor.u32 %v600, 2147483648
    %v611 = vxor.u32 %v602, 2147483648
    %v612 = vxor.u32 %v606, 2147483648
    %v613 = vxor.u32 %v608, 2147483648
    %v614 = vmul.f32 %v610, 1.442695
    %v615 = vpow.pop %v614
    %v616 = vmul.f32 %v611, 1.442695
    %v617 = vpow.pop %v616
    %v618 = vmul.f32 %v612, 1.442695
    %v619 = vpow.pop %v618
    %v620 = vmul.f32 %v613, 1.442695
    %v621 = vpow.pop %v620
    %v622 = vadd.f32 %v615, 1.0
    %v623 = vadd.f32 %v617, 1.0
    %v624 = vadd.f32 %v619, 1.0
    %v625 = vadd.f32 %v621, 1.0
    %v626 = vrcp.pop %v622
    %v627 = vmul.f32 1.0, %v626
    %v628 = vrcp.pop %v623
    %v629 = vmul.f32 1.0, %v628
    %v630 = vrcp.pop %v624
    %v631 = vmul.f32 1.0, %v630
    %v632 = vrcp.pop %v625
    %v633 = vmul.f32 1.0, %v632
    %v634 = vmul.f32 %v600, %v627
    %v635 = vmul.f32 %v602, %v629
    %v636 = vmul.f32 %v606, %v631
    %v637 = vmul.f32 %v608, %v633
    %638 = vst [vmem:[#allocation5] sm:$0xff] %v634
    %639 = vst [vmem:[#allocation5 + $0x8] sm:$0xff] %v635
    %640 = vst [vmem:[#allocation5 + $0x10] sm:$0xff] %v636
    %641 = vst [vmem:[#allocation5 + $0x18] sm:$0xff] %v637
    // Predicated region
    $region26: #{tpu_custom_call.1} parent=1 // pred_check
      _
    $region27: #{tpu_custom_call.1} parent=1 // pred_check_branch
      %643 = sbr.rel (0) target = $region29
    $region28: #{tpu_custom_call.1} parent=1 // pred_region
      %s645 = ssub.s32 512, 512
      %646 = vsyncadd [#allocation4], %s645
      %s647 = sshll.u32 [#allocation5], 4
      %s648 = int_to_ptr.vmem [resolvable:$true] %s647
      %653 = dma.vmem_to_hbm [thread:$0]  %s648, 512, %s5, [#allocation4], 256, 256, 16
    $region29: #{tpu_custom_call.1} parent=1 // pred_fallthru
      _
    // Predicated region
    $region30: #{tpu_custom_call.1} parent=1 // pred_check
      _
    $region31: #{tpu_custom_call.1} parent=1 // pred_check_branch
      %655 = sbr.rel (0) target = $region33
    $region32: #{tpu_custom_call.1} parent=1 // pred_region
      %656 = dma.done [#allocation4], 512
    $region33: #{tpu_custom_call.1} parent=1 // pred_fallthru
      _
    %657 = vsyncpa [#allocation3], 1
    %658 = vsyncpa [#allocation4], 1

</llo_original>
